<compile_context>
chip_gen: v7x
topology: tpu7x:2x2x1
jax: 0.10.0
libtpu: 0.0.40
codegen_flags: <defaults>
</compile_context>

<pallas_src>
import functools

import jax
import jax.numpy as jnp
from jax.experimental import pallas as pl
from jax.experimental.pallas import tpu as pltpu


def _round_up(n: int, m: int) -> int:
    return m * pl.cdiv(n, m)


def _rnn_kernel(x_ref, h_ref, wx_ref, wh_ref, b_ref, out_ref, *,
                hidden_size: int, output_size: int):
    """One grid step over a batch tile.

    x_ref  : [TB, I]      input tile
    h_ref  : [TB, H]      previous hidden tile
    wx_ref : [I, W]       fused (i2h|i2o) weight rows for the input features
    wh_ref : [H, W]       fused (i2h|i2o) weight rows for the hidden features
    b_ref  : [1, W]       fused (bh|bo) bias, zero-padded to W lanes
    out_ref: [TB, W]      cols 0:H -> new hidden, cols H:H+O -> log-softmax(logits)
    """
    # Single fused, lane-dense matmul result (no concat of x/h needed).
    z = (jnp.dot(x_ref[...], wx_ref[...], preferred_element_type=jnp.float32)
         + jnp.dot(h_ref[...], wh_ref[...], preferred_element_type=jnp.float32)
         + b_ref[...])

    # Numerically stable log-softmax over the valid logit columns only,
    # computed on the full 128-lane vreg with a mask (XLU/EUP stay lane-dense).
    col = jax.lax.broadcasted_iota(jnp.int32, z.shape, 1)
    is_logit = (col >= hidden_size) & (col < hidden_size + output_size)

    neg_inf = jnp.float32(-jnp.inf)
    masked = jnp.where(is_logit, z, neg_inf)
    m = jnp.max(masked, axis=1, keepdims=True)
    s = jnp.sum(jnp.exp(masked - m), axis=1, keepdims=True)
    lse = m + jnp.log(s)

    # Logit columns get log-softmax; hidden (and pad) columns pass z through.
    out_ref[...] = jnp.where(is_logit, z - lse, z).astype(out_ref.dtype)


def prepare_params(wh, bh, wo, bo, input_size, param_dtype=jnp.float32):
    """One-time weight preparation (hoisted out of the per-call path).

    wh : [H, I+H]  i2h weight (PyTorch Linear layout [out, in])
    bh : [H]
    wo : [O, I+H]  i2o weight
    bo : [O]

    Returns (wx_cat [I, W], wh_cat [H, W], b_cat [1, W], (I, H, O, W)) where
    W = 128-multiple >= H + O.  param_dtype may be jnp.bfloat16 on v6e/v7x to
    halve weight traffic (accumulation stays f32 in-kernel).
    """
    H, C = wh.shape
    O = wo.shape[0]
    I = input_size
    assert C == I + H, "weight in_features must equal input_size + hidden_size"

    W = _round_up(H + O, 128)
    pad = W - (H + O)

    w_cat = jnp.concatenate([wh.T, wo.T], axis=1)              # [C, H+O]
    w_cat = jnp.pad(w_cat, ((0, 0), (0, pad)))                 # [C, W]
    wx_cat = w_cat[:I, :].astype(param_dtype)                  # [I, W]
    wh_cat = w_cat[I:, :].astype(param_dtype)                  # [H, W]

    b_cat = jnp.pad(jnp.concatenate([bh, bo]), (0, pad))
    b_cat = b_cat.reshape(1, W).astype(jnp.float32)            # [1, W]

    return wx_cat, wh_cat, b_cat, (I, H, O, W)


def rnn_forward(x, hidden, params):
    """Pallas equivalent of RNN.forward.

    x      : [B, input_size]
    hidden : [B, hidden_size]
    params : output of prepare_params()
    returns (log_softmax_output [B, output_size], new_hidden [B, hidden_size])
    """
    wx_cat, wh_cat, b_cat, (I, H, O, W) = params
    B = x.shape[0]

    # Pad batch to a sublane multiple (8 for f32); tile large batches so the
    # grid axis can shard across TensorCores (v7x megacore).
    B_pad = _round_up(B, 8)
    TB = B_pad if B_pad <= 512 else 512
    B_pad = _round_up(B_pad, TB)
    if B_pad != B:
        x = jnp.pad(x, ((0, B_pad - B), (0, 0)))
        hidden = jnp.pad(hidden, ((0, B_pad - B), (0, 0)))

    x = x.astype(wx_cat.dtype)
    hidden = hidden.astype(wh_cat.dtype)

    kernel = functools.partial(_rnn_kernel, hidden_size=H, output_size=O)

    out = pl.pallas_call(
        kernel,
        out_shape=jax.ShapeDtypeStruct((B_pad, W), jnp.float32),
        grid=(B_pad // TB,),
        in_specs=[
            pl.BlockSpec((TB, I), lambda i: (i, 0)),   # x tile
            pl.BlockSpec((TB, H), lambda i: (i, 0)),   # hidden tile
            pl.BlockSpec((I, W), lambda i: (0, 0)),    # fused weights (resident)
            pl.BlockSpec((H, W), lambda i: (0, 0)),
            pl.BlockSpec((1, W), lambda i: (0, 0)),    # fused bias
        ],
        out_specs=pl.BlockSpec((TB, W), lambda i: (i, 0)),
        compiler_params=pltpu.CompilerParams(
            dimension_semantics=("parallel",)),
    )(x, hidden, wx_cat, wh_cat, b_cat)

    new_hidden = out[:B, :H]
    log_probs = out[:B, H:H + O]
    return log_probs, new_hidden

    # TODO(synk): if this cell is driven over many timesteps, fold the whole
    # sequence into one pallas_call (grid=(T,), hidden carried in VMEM scratch)
    # to eliminate per-step launch and hidden-state HBM round trips.


def _reference_forward(x, hidden, wh, bh, wo, bo):
    combo = jnp.concatenate([x, hidden], axis=1)
    new_hidden = combo @ wh.T + bh
    logits = combo @ wo.T + bo
    return jax.nn.log_softmax(logits, axis=1), new_hidden


if __name__ == "__main__":
    # Small shapes consistent with the module's forward (batch kept a multiple
    # of 8 so no padding path is needed; wrapper handles other batches too).
    batch = 8
    input_size = 16
    hidden_size = 32
    output_size = 10

    key = jax.random.PRNGKey(0)
    kx, kh, kwh, kbh, kwo, kbo = jax.random.split(key, 6)

    x = jax.random.normal(kx, (batch, input_size), dtype=jnp.float32)
    hidden0 = jnp.zeros((batch, hidden_size), dtype=jnp.float32)  # init_hidden

    c = input_size + hidden_size
    wh = 0.1 * jax.random.normal(kwh, (hidden_size, c), dtype=jnp.float32)
    bh = 0.1 * jax.random.normal(kbh, (hidden_size,), dtype=jnp.float32)
    wo = 0.1 * jax.random.normal(kwo, (output_size, c), dtype=jnp.float32)
    bo = 0.1 * jax.random.normal(kbo, (output_size,), dtype=jnp.float32)

    # One-time (hoisted) weight preparation, then the fused kernel call.
    params = prepare_params(wh, bh, wo, bo, input_size, param_dtype=jnp.float32)
    out, new_hidden = rnn_forward(x, hidden0, params)
    jax.block_until_ready((out, new_hidden))

    # Sanity check against plain-JAX reference.
    ref_out, ref_hidden = _reference_forward(x, hidden0, wh, bh, wo, bo)
    assert jnp.allclose(out, ref_out, atol=1e-5, rtol=1e-5), "output mismatch"
    assert jnp.allclose(new_hidden, ref_hidden, atol=1e-5, rtol=1e-5), "hidden mismatch"

    print("KERNEL_OK")
</pallas_src>

<mosaic_0001>
module attributes {stable_mosaic.version = 11 : i64} {
  func.func @_rnn_kernel(%arg0: i32, %arg1: memref<8x16xf32, #tpu.memory_space<vmem>>, %arg2: memref<8x32xf32, #tpu.memory_space<vmem>>, %arg3: memref<16x128xf32, #tpu.memory_space<vmem>>, %arg4: memref<32x128xf32, #tpu.memory_space<vmem>>, %arg5: memref<1x128xf32, #tpu.memory_space<vmem>>, %arg6: memref<8x128xf32, #tpu.memory_space<vmem>>) attributes {dimension_semantics = [#tpu.dimension_semantics<parallel>], iteration_bounds = array<i64: 1>, scalar_prefetch = 0 : i64, scratch_operands = 0 : i64, tpu.core_type = #tpu.core_type<tc>, window_params = [{transform_indices = @transform_0, window_bounds = array<i64: 8, 16>}, {transform_indices = @transform_1, window_bounds = array<i64: 8, 32>}, {pipeline_mode = #tpu.pipeline_mode<synchronous>, transform_indices = @transform_2, window_bounds = array<i64: 16, 128>}, {pipeline_mode = #tpu.pipeline_mode<synchronous>, transform_indices = @transform_3, window_bounds = array<i64: 32, 128>}, {pipeline_mode = #tpu.pipeline_mode<synchronous>, transform_indices = @transform_4, window_bounds = array<i64: 1, 128>}, {transform_indices = @transform_5, window_bounds = array<i64: 8, 128>}]} {
    %c0 = arith.constant 0 : index
    %c0_0 = arith.constant 0 : index
    %0 = vector.load %arg1[%c0, %c0_0] : memref<8x16xf32, #tpu.memory_space<vmem>>, vector<8x16xf32>
    %c0_1 = arith.constant 0 : index
    %c0_2 = arith.constant 0 : index
    %1 = vector.load %arg3[%c0_1, %c0_2] : memref<16x128xf32, #tpu.memory_space<vmem>>, vector<16x128xf32>
    %cst = arith.constant dense<0.000000e+00> : vector<8x128xf32>
    %2 = tpu.matmul %0, %1, %cst {dimension_numbers = #tpu.dot_dimension_numbers<[1], [0], [0], [1], [0, 0, 1, 1], [], []>} : vector<8x16xf32>, vector<16x128xf32>, vector<8x128xf32> -> vector<8x128xf32>
    %c0_3 = arith.constant 0 : index
    %c0_4 = arith.constant 0 : index
    %3 = vector.load %arg2[%c0_3, %c0_4] : memref<8x32xf32, #tpu.memory_space<vmem>>, vector<8x32xf32>
    %c0_5 = arith.constant 0 : index
    %c0_6 = arith.constant 0 : index
    %4 = vector.load %arg4[%c0_5, %c0_6] : memref<32x128xf32, #tpu.memory_space<vmem>>, vector<32x128xf32>
    %cst_7 = arith.constant dense<0.000000e+00> : vector<8x128xf32>
    %5 = tpu.matmul %3, %4, %cst_7 {dimension_numbers = #tpu.dot_dimension_numbers<[1], [0], [0], [1], [0, 0, 1, 1], [], []>} : vector<8x32xf32>, vector<32x128xf32>, vector<8x128xf32> -> vector<8x128xf32>
    %6 = arith.addf %2, %5 : vector<8x128xf32>
    %c0_8 = arith.constant 0 : index
    %c0_9 = arith.constant 0 : index
    %7 = vector.load %arg5[%c0_8, %c0_9] : memref<1x128xf32, #tpu.memory_space<vmem>>, vector<1x128xf32>
    %8 = vector.broadcast %7 : vector<1x128xf32> to vector<8x128xf32>
    %9 = arith.addf %6, %8 : vector<8x128xf32>
    %10 = tpu.iota {dimensions = array<i32: 1>} : vector<8x128xi32>
    %c32_i32 = arith.constant 32 : i32
    %11 = vector.broadcast %c32_i32 : i32 to vector<8x128xi32>
    %12 = arith.cmpi sge, %10, %11 : vector<8x128xi32>
    %c42_i32 = arith.constant 42 : i32
    %13 = vector.broadcast %c42_i32 : i32 to vector<8x128xi32>
    %14 = arith.cmpi slt, %10, %13 : vector<8x128xi32>
    %15 = arith.andi %12, %14 : vector<8x128xi1>
    %cst_10 = arith.constant 0xFF800000 : f32
    %16 = vector.broadcast %cst_10 : f32 to vector<8x128xf32>
    %17 = arith.select %15, %9, %16 : vector<8x128xi1>, vector<8x128xf32>
    %cst_11 = arith.constant dense<0xFF800000> : vector<8xf32>
    %18 = vector.multi_reduction <maximumf>, %17, %cst_11 [1] : vector<8x128xf32> to vector<8xf32>
    %19 = vector.shape_cast %18 : vector<8xf32> to vector<8x1xf32>
    %20 = vector.broadcast %19 : vector<8x1xf32> to vector<8x128xf32>
    %21 = arith.subf %17, %20 : vector<8x128xf32>
    %22 = math.exp %21 : vector<8x128xf32>
    %cst_12 = arith.constant dense<0.000000e+00> : vector<8xf32>
    %23 = vector.multi_reduction <add>, %22, %cst_12 [1] : vector<8x128xf32> to vector<8xf32>
    %24 = vector.shape_cast %23 : vector<8xf32> to vector<8x1xf32>
    %25 = math.log %24 : vector<8x1xf32>
    %26 = arith.addf %19, %25 : vector<8x1xf32>
    %27 = vector.broadcast %26 : vector<8x1xf32> to vector<8x128xf32>
    %28 = arith.subf %9, %27 : vector<8x128xf32>
    %29 = arith.select %15, %28, %9 : vector<8x128xi1>, vector<8x128xf32>
    %c0_13 = arith.constant 0 : index
    %c0_14 = arith.constant 0 : index
    %30 = vector.load %arg6[%c0_13, %c0_14] : memref<8x128xf32, #tpu.memory_space<vmem>>, vector<8x128xf32>
    tpu.vector_store %arg6[%c0_13, %c0_14], %29 {strides = array<i32>} : memref<8x128xf32, #tpu.memory_space<vmem>>, vector<8x128xf32>,
    return
  }
  func.func @transform_0(%arg0: i32) -> (i32, i32) {
    %c0_i32 = arith.constant 0 : i32
    %c0_i32_0 = arith.constant 0 : i32
    return %arg0, %c0_i32 : i32, i32
  }
  func.func @transform_1(%arg0: i32) -> (i32, i32) {
    %c0_i32 = arith.constant 0 : i32
    %c0_i32_0 = arith.constant 0 : i32
    return %arg0, %c0_i32 : i32, i32
  }
  func.func @transform_2(%arg0: i32) -> (i32, i32) {
    %c0_i32 = arith.constant 0 : i32
    %c0_i32_0 = arith.constant 0 : i32
    %c0_i32_1 = arith.constant 0 : i32
    return %c0_i32, %c0_i32_0 : i32, i32
  }
  func.func @transform_3(%arg0: i32) -> (i32, i32) {
    %c0_i32 = arith.constant 0 : i32
    %c0_i32_0 = arith.constant 0 : i32
    %c0_i32_1 = arith.constant 0 : i32
    return %c0_i32, %c0_i32_0 : i32, i32
  }
  func.func @transform_4(%arg0: i32) -> (i32, i32) {
    %c0_i32 = arith.constant 0 : i32
    %c0_i32_0 = arith.constant 0 : i32
    %c0_i32_1 = arith.constant 0 : i32
    return %c0_i32, %c0_i32_0 : i32, i32
  }
  func.func @transform_5(%arg0: i32) -> (i32, i32) {
    %c0_i32 = arith.constant 0 : i32
    %c0_i32_0 = arith.constant 0 : i32
    return %arg0, %c0_i32 : i32, i32
  }
}

</mosaic_0001>

<llo_original>
// kernel: tpu_custom_call.1
$region0: #{tpu_custom_call.1}
  #allocation0 [shape = 'u32[]', space=smem, size = 0x4, offset = 0x4, fixed_abs, tag = 'smem constant byte address 0x4 - core index']
  #allocation1 [shape = 'u32[144,128]{1,0:T(1,128)}', space=vmem, size = 0x12000, scoped, tag = 'internal scratch']
  %s0 = inlined_call_operand.hbm [shape: f32[8,16], index: 0, kind: input, shape index: {}]
  %s1 = inlined_call_operand.hbm [shape: f32[8,32], index: 1, kind: input, shape index: {}]
  %s2 = inlined_call_operand.hbm [shape: f32[16,128], index: 2, kind: input, shape index: {}]
  %s3 = inlined_call_operand.hbm [shape: f32[32,128], index: 3, kind: input, shape index: {}]
  %s4 = inlined_call_operand.vmem [shape: f32[1,128], index: 4, kind: input, shape index: {}]
  %s5 = inlined_call_operand.hbm [shape: f32[8,128], index: 5, kind: output, shape index: {}]
  %s6 = sld [smem:[#allocation0]]
  $region46: #{tpu_custom_call.1} parent=0
    _
  %s8 = ssub.s32 1, %s6
  %s9 = scalar_select 0, %s8, %s6
  $region1: #{tpu_custom_call.1} parent=0
    #allocation2 [shape = 'u8[4096]{0}', space=vmem, size = 0x1000, scoped, tag = 'input window, operand 0, single buffered']
    #allocation3 [shape = 's32[1]{0}', space=sflag, size = 0x4, scoped, tag = 'scoped memory for tpu_custom_call.1']
    #allocation4 [shape = 's32[1]{0}', space=sflag, size = 0x4, scoped, tag = 'scoped memory for tpu_custom_call.1']
    #allocation5 [shape = 'u8[4096]{0}', space=vmem, size = 0x1000, scoped, tag = 'input window, operand 1, single buffered']
    #allocation6 [shape = 's32[1]{0}', space=sflag, size = 0x4, scoped, tag = 'scoped memory for tpu_custom_call.1']
    #allocation7 [shape = 'u8[8192]{0}', space=vmem, size = 0x2000, scoped, tag = 'input window, operand 2, single buffered']
    #allocation8 [shape = 'u8[16384]{0}', space=vmem, size = 0x4000, scoped, tag = 'input window, operand 3, single buffered']
    #allocation9 [shape = 's32[1]{0}', space=sflag, size = 0x4, scoped, tag = 'scoped memory for tpu_custom_call.1']
    #allocation10 [shape = 'u8[4096]{0}', space=vmem, size = 0x1000, scoped, tag = 'output window, operand 0, single buffered']
    %10 = vsyncpa [#allocation3], 0
    %11 = vsyncpa [#allocation6], 0
    %12 = vsyncpa [#allocation9], 0
    %13 = vsyncpa [#allocation4], 0
    // Predicated region
    $region2: #{tpu_custom_call.1} parent=1 // pred_check
      _
    $region3: #{tpu_custom_call.1} parent=1 // pred_check_branch
      %15 = sbr.rel (0) target = $region5
    $region4: #{tpu_custom_call.1} parent=1 // pred_region
      %s17 = ssub.s32 128, 128
      %18 = vsyncadd [#allocation3], %s17
      %s20 = sshll.u32 [#allocation2], 4
      %s21 = int_to_ptr.vmem [resolvable:$true] %s20
      %23 = dma.hbm_to_vmem [thread:$0]  %s0, 128, %s21, [#allocation3]
    $region5: #{tpu_custom_call.1} parent=1 // pred_fallthru
      _
    // Predicated region
    $region6: #{tpu_custom_call.1} parent=1 // pred_check
      _
    $region7: #{tpu_custom_call.1} parent=1 // pred_check_branch
      %25 = sbr.rel (0) target = $region9
    $region8: #{tpu_custom_call.1} parent=1 // pred_region
      %s27 = ssub.s32 128, 128
      %28 = vsyncadd [#allocation6], %s27
      %s30 = sshll.u32 [#allocation5], 4
      %s31 = int_to_ptr.vmem [resolvable:$true] %s30
      %33 = dma.hbm_to_vmem [thread:$0]  %s1, 128, %s31, [#allocation6]
    $region9: #{tpu_custom_call.1} parent=1 // pred_fallthru
      _
    // Predicated region
    $region10: #{tpu_custom_call.1} parent=1 // pred_check
      _
    $region11: #{tpu_custom_call.1} parent=1 // pred_check_branch
      %35 = sbr.rel (0) target = $region13
    $region12: #{tpu_custom_call.1} parent=1 // pred_region
      %s37 = ssub.s32 256, 256
      %38 = vsyncadd [#allocation6], %s37
      %s39 = sshll.u32 [#allocation7], 4
      %s40 = int_to_ptr.vmem [resolvable:$true] %s39
      %45 = dma.hbm_to_vmem [thread:$0]  %s2, 256, %s40, [#allocation6], 128, 128, 8
    $region13: #{tpu_custom_call.1} parent=1 // pred_fallthru
      _
    // Predicated region
    $region14: #{tpu_custom_call.1} parent=1 // pred_check
      _
    $region15: #{tpu_custom_call.1} parent=1 // pred_check_branch
      %47 = sbr.rel (0) target = $region17
    $region16: #{tpu_custom_call.1} parent=1 // pred_region
      %s49 = ssub.s32 512, 512
      %50 = vsyncadd [#allocation9], %s49
      %s51 = sshll.u32 [#allocation8], 4
      %s52 = int_to_ptr.vmem [resolvable:$true] %s51
      %57 = dma.hbm_to_vmem [thread:$0]  %s3, 512, %s52, [#allocation9], 128, 128, 8
    $region17: #{tpu_custom_call.1} parent=1 // pred_fallthru
      _
    // Predicated region
    $region18: #{tpu_custom_call.1} parent=1 // pred_check
      _
    $region19: #{tpu_custom_call.1} parent=1 // pred_check_branch
      %59 = sbr.rel (0) target = $region21
    $region20: #{tpu_custom_call.1} parent=1 // pred_region
      _
    $region21: #{tpu_custom_call.1} parent=1 // pred_fallthru
      _
    // Predicated region
    $region22: #{tpu_custom_call.1} parent=1 // pred_check
      _
    $region23: #{tpu_custom_call.1} parent=1 // pred_check_branch
      %61 = sbr.rel (0) target = $region25
    $region24: #{tpu_custom_call.1} parent=1 // pred_region
      %62 = dma.done [#allocation3], 128
    $region25: #{tpu_custom_call.1} parent=1 // pred_fallthru
      _
    // Predicated region
    $region26: #{tpu_custom_call.1} parent=1 // pred_check
      _
    $region27: #{tpu_custom_call.1} parent=1 // pred_check_branch
      %64 = sbr.rel (0) target = $region29
    $region28: #{tpu_custom_call.1} parent=1 // pred_region
      %65 = dma.done [#allocation6], 128
    $region29: #{tpu_custom_call.1} parent=1 // pred_fallthru
      _
    // Predicated region
    $region30: #{tpu_custom_call.1} parent=1 // pred_check
      _
    $region31: #{tpu_custom_call.1} parent=1 // pred_check_branch
      %67 = sbr.rel (0) target = $region33
    $region32: #{tpu_custom_call.1} parent=1 // pred_region
      %68 = dma.done [#allocation6], 256
    $region33: #{tpu_custom_call.1} parent=1 // pred_fallthru
      _
    // Predicated region
    $region34: #{tpu_custom_call.1} parent=1 // pred_check
      _
    $region35: #{tpu_custom_call.1} parent=1 // pred_check_branch
      %70 = sbr.rel (0) target = $region37
    $region36: #{tpu_custom_call.1} parent=1 // pred_region
      %71 = dma.done [#allocation9], 512
    $region37: #{tpu_custom_call.1} parent=1 // pred_fallthru
      _
    %v72 = vld [vmem:[#allocation2] sm:$0xff]
    %v73 = vld [vmem:[#allocation7] sm:$0xff]
    %v74 = vld [vmem:[#allocation7 + $0x8] sm:$0xff]
    %v75 = vld [vmem:[#allocation5] sm:$0xff]
    %v76 = vld [vmem:[#allocation8] sm:$0xff]
    %v77 = vld [vmem:[#allocation8 + $0x8] sm:$0xff]
    %v78 = vld [vmem:[#allocation8 + $0x10] sm:$0xff]
    %v79 = vld [vmem:[#allocation8 + $0x18] sm:$0xff]
    %vm80 = vcmask 261120
    %v82 = vsel %vm80, %v75, 0
    %84 = vmatprep.subr.mxu0 0.0
    %85 = vmatpush1.msra.mxu0 %v76
    %86 = vmatprep.subr.mxu0 0.0
    %87 = vmatpush1.msra.mxu0 %v77
    %88 = vmatprep.subr.mxu0 0.0
    %89 = vmatpush1.msra.mxu0 %v78
    %90 = vmatprep.subr.mxu0 0.0
    %91 = vmatpush1.msra.mxu0 %v79
    %92 = vmatprep.subr.mxu0 0.0
    %93 = vmatpush1.msra.mxu0 0.0
    %94 = vmatprep.subr.mxu0 0.0
    %95 = vmatpush1.msra.mxu0 0.0
    %96 = vmatprep.subr.mxu0 0.0
    %97 = vmatpush1.msra.mxu0 0.0
    %98 = vmatprep.subr.mxu0 0.0
    %99 = vmatpush1.msra.mxu0 0.0
    %100 = vmatprep.subr.mxu0 0.0
    %101 = vmatpush1.msra.mxu0 0.0
    %102 = vmatprep.subr.mxu0 0.0
    %103 = vmatpush1.msra.mxu0 0.0
    %104 = vmatprep.subr.mxu0 0.0
    %105 = vmatpush1.msra.mxu0 0.0
    %106 = vmatprep.subr.mxu0 0.0
    %107 = vmatpush1.msra.mxu0 0.0
    %108 = vmatprep.subr.mxu0 0.0
    %109 = vmatpush1.msra.mxu0 0.0
    %110 = vmatprep.subr.mxu0 0.0
    %111 = vmatpush1.msra.mxu0 0.0
    %112 = vmatprep.subr.mxu0 0.0
    %113 = vmatpush1.msra.mxu0 0.0
    %114 = vmatprep.subr.mxu0 0.0
    %115 = vmatpush1.msra.mxu0 0.0
    %116 = vmatprep.subr.mxu0 0.0
    %117 = vmatpush1.msra.mxu0 0.0
    %118 = vmatprep.subr.mxu0 0.0
    %119 = vmatpush1.msra.mxu0 0.0
    %120 = vmatprep.subr.mxu0 0.0
    %121 = vmatpush1.msra.mxu0 0.0
    %122 = vmatprep.subr.mxu0 0.0
    %123 = vmatpush1.msra.mxu0 0.0
    %124 = vmatprep.subr.mxu0 0.0
    %125 = vmatpush1.msra.mxu0 0.0
    %126 = vmatprep.subr.mxu0 0.0
    %127 = vmatpush1.msra.mxu0 0.0
    %128 = vmatprep.subr.mxu0 0.0
    %129 = vmatpush1.msra.mxu0 0.0
    %130 = vmatprep.subr.mxu0 0.0
    %131 = vmatpush1.msra.mxu0 0.0
    %132 = vmatprep.subr.mxu0 0.0
    %133 = vmatpush1.msra.mxu0 0.0
    %134 = vmatprep.subr.mxu0 0.0
    %135 = vmatpush1.msra.mxu0 0.0
    %136 = vmatprep.subr.mxu0 0.0
    %137 = vmatpush1.msra.mxu0 0.0
    %138 = vmatprep.subr.mxu0 0.0
    %139 = vmatpush1.msra.mxu0 0.0
    %140 = vmatprep.subr.mxu0 0.0
    %141 = vmatpush1.msra.mxu0 0.0
    %142 = vmatprep.subr.mxu0 0.0
    %143 = vmatpush1.msra.mxu0 0.0
    %144 = vmatprep.subr.mxu0 0.0
    %145 = vmatpush1.msra.mxu0 0.0
    %146 = vmatprep.subr.mxu0 0.0
    %147 = vmatpush1.msra.mxu0 0.0
    %148 = vmatprep.mubr.f32.mxu0 0.0
    %149 = vmatmul.mubr.f32.gmra.mrb[0].mxu0 %v82
    %v150 = vpop.f32.mrb[0].mxu0
    %v151 = vadd.f32 0.0, %v150
    %v152 = vpop.f32.mrb[0].mxu0
    %153 = vdwg.mxu0
    %vm154 = vcmask 130048
    %v156 = vsel %vm154, %v72, 0
    %158 = vmatprep.subr.mxu0 0.0
    %159 = vmatpush1.msra.mxu0 %v73
    %160 = vmatprep.subr.mxu0 0.0
    %161 = vmatpush1.msra.mxu0 %v74
    %162 = vmatprep.subr.mxu0 0.0
    %163 = vmatpush1.msra.mxu0 0.0
    %164 = vmatprep.subr.mxu0 0.0
    %165 = vmatpush1.msra.mxu0 0.0
    %166 = vmatprep.subr.mxu0 0.0
    %167 = vmatpush1.msra.mxu0 0.0
    %168 = vmatprep.subr.mxu0 0.0
    %169 = vmatpush1.msra.mxu0 0.0
    %170 = vmatprep.subr.mxu0 0.0
    %171 = vmatpush1.msra.mxu0 0.0
    %172 = vmatprep.subr.mxu0 0.0
    %173 = vmatpush1.msra.mxu0 0.0
    %174 = vmatprep.subr.mxu0 0.0
    %175 = vmatpush1.msra.mxu0 0.0
    %176 = vmatprep.subr.mxu0 0.0
    %177 = vmatpush1.msra.mxu0 0.0
    %178 = vmatprep.subr.mxu0 0.0
    %179 = vmatpush1.msra.mxu0 0.0
    %180 = vmatprep.subr.mxu0 0.0
    %181 = vmatpush1.msra.mxu0 0.0
    %182 = vmatprep.subr.mxu0 0.0
    %183 = vmatpush1.msra.mxu0 0.0
    %184 = vmatprep.subr.mxu0 0.0
    %185 = vmatpush1.msra.mxu0 0.0
    %186 = vmatprep.subr.mxu0 0.0
    %187 = vmatpush1.msra.mxu0 0.0
    %188 = vmatprep.subr.mxu0 0.0
    %189 = vmatpush1.msra.mxu0 0.0
    %190 = vmatprep.subr.mxu0 0.0
    %191 = vmatpush1.msra.mxu0 0.0
    %192 = vmatprep.subr.mxu0 0.0
    %193 = vmatpush1.msra.mxu0 0.0
    %194 = vmatprep.subr.mxu0 0.0
    %195 = vmatpush1.msra.mxu0 0.0
    %196 = vmatprep.subr.mxu0 0.0
    %197 = vmatpush1.msra.mxu0 0.0
    %198 = vmatprep.subr.mxu0 0.0
    %199 = vmatpush1.msra.mxu0 0.0
    %200 = vmatprep.subr.mxu0 0.0
    %201 = vmatpush1.msra.mxu0 0.0
    %202 = vmatprep.subr.mxu0 0.0
    %203 = vmatpush1.msra.mxu0 0.0
    %204 = vmatprep.subr.mxu0 0.0
    %205 = vmatpush1.msra.mxu0 0.0
    %206 = vmatprep.subr.mxu0 0.0
    %207 = vmatpush1.msra.mxu0 0.0
    %208 = vmatprep.subr.mxu0 0.0
    %209 = vmatpush1.msra.mxu0 0.0
    %210 = vmatprep.subr.mxu0 0.0
    %211 = vmatpush1.msra.mxu0 0.0
    %212 = vmatprep.subr.mxu0 0.0
    %213 = vmatpush1.msra.mxu0 0.0
    %214 = vmatprep.subr.mxu0 0.0
    %215 = vmatpush1.msra.mxu0 0.0
    %216 = vmatprep.subr.mxu0 0.0
    %217 = vmatpush1.msra.mxu0 0.0
    %218 = vmatprep.subr.mxu0 0.0
    %219 = vmatpush1.msra.mxu0 0.0
    %220 = vmatprep.subr.mxu0 0.0
    %221 = vmatpush1.msra.mxu0 0.0
    %222 = vmatprep.mubr.f32.mxu0 0.0
    %223 = vmatmul.mubr.f32.gmra.mrb[0].mxu0 %v156
    %v224 = vpop.f32.mrb[0].mxu0
    %v225 = vadd.f32 %v151, %v224
    %v226 = vpop.f32.mrb[0].mxu0
    %227 = vdwg.mxu0
    %v228 = vld [vmem:[%s4] sm:$0x1]
    %v230 = vlaneseq
    %v231 = vshrl.u32 %v230, 7
    %v232 = vsub.s32 0, %v231
    %v233 = vrot.slane %v228, %v232
    %v235 = vadd.f32 %v225, %v233
    %v236 = vlaneseq
    %v237 = vand.u32 %v236, 127
    %vm238 = vcmp.ge.s32.totalorder %v237, 32
    %vm239 = vcmp.lt.s32.totalorder %v237, 42
    %vm240 = vmand %vm238, %vm239
    %v241 = vsel %vm240, %v235, -inf
    %242 = vmax.xlane.f32.xlu0 %v241
    %v243 = vpop.xlane.xlu0 %242
    %v244 = vsub.f32 %v241, %v243
    %v245 = vmul.f32 %v244, 1.442695
    %v246 = vpow.pop %v245
    %247 = vadd.xlane.f32.xlu0 %v246
    %v248 = vpop.xlane.xlu0 %247
    %v249 = vlog2.pop %v248
    %v250 = vmul.f32 %v249, 0.6931472
    %v251 = vadd.f32 %v243, %v250
    %v252 = vsub.f32 %v235, %v251
    %v253 = vsel %vm240, %v252, %v235
    %254 = vst [vmem:[#allocation10] sm:$0xff] %v253
    // Predicated region
    $region38: #{tpu_custom_call.1} parent=1 // pred_check
      _
    $region39: #{tpu_custom_call.1} parent=1 // pred_check_branch
      %256 = sbr.rel (0) target = $region41
    $region40: #{tpu_custom_call.1} parent=1 // pred_region
      %s258 = ssub.s32 128, 128
      %259 = vsyncadd [#allocation4], %s258
      %s261 = sshll.u32 [#allocation10], 4
      %s262 = int_to_ptr.vmem [resolvable:$true] %s261
      %264 = dma.vmem_to_hbm [thread:$0]  %s262, 128, %s5, [#allocation4]
    $region41: #{tpu_custom_call.1} parent=1 // pred_fallthru
      _
    // Predicated region
    $region42: #{tpu_custom_call.1} parent=1 // pred_check
      _
    $region43: #{tpu_custom_call.1} parent=1 // pred_check_branch
      %266 = sbr.rel (0) target = $region45
    $region44: #{tpu_custom_call.1} parent=1 // pred_region
      %267 = dma.done [#allocation4], 128
    $region45: #{tpu_custom_call.1} parent=1 // pred_fallthru
      _
    %268 = vsyncpa [#allocation3], 1
    %269 = vsyncpa [#allocation6], 1
    %270 = vsyncpa [#allocation9], 1
    %271 = vsyncpa [#allocation4], 1

</llo_original>
